<compile_context>
chip_gen: v7x
topology: tpu7x:2x2x1
jax: 0.10.0
libtpu: 0.0.40
codegen_flags: <defaults>
</compile_context>

<pallas_src>
import functools
import math

import jax
import jax.numpy as jnp
from jax import lax
from jax.experimental import pallas as pl
from jax.experimental.pallas import tpu as pltpu

_SQRT2_INV = 1.0 / math.sqrt(2.0)
_BN_EPS = 1e-5
_LANE = 128
_VMEM_LIMIT = 48 * 1024 * 1024  # fits v7x (64 MiB physical) and below

# Flip to True on v6e/v7x to feed the MXU with bf16 operands (f32 accumulate)
# for ~2x MXU throughput; kept False so results track the f32 PyTorch module.
_USE_BF16_MXU = False


def _round_up(x, m):
    return (x + m - 1) // m * m


def _gelu(x):
    # exact (erf-based) GELU, matching torch.nn.GELU() default
    return 0.5 * x * (1.0 + lax.erf(x * _SQRT2_INV))


# --------------------------------------------------------------------------
# Kernel 1: y = BN_affine(GELU(x @ W + b))   (patch-embedding conv)
# --------------------------------------------------------------------------
def _matmul_gelu_affine_kernel(x_ref, w_ref, b_ref, s_ref, t_ref, o_ref,
                               *, use_bf16):
    x = x_ref[...].astype(jnp.float32)
    w = w_ref[...].astype(jnp.float32)
    if use_bf16:
        x = x.astype(jnp.bfloat16)
        w = w.astype(jnp.bfloat16)
    y = jnp.dot(x, w, preferred_element_type=jnp.float32) + b_ref[...]
    y = _gelu(y)
    o_ref[...] = y * s_ref[...] + t_ref[...]


def matmul_gelu_affine(x, w, b, scale, shift, *, tm_max=256):
    M, K = x.shape
    Kw, Nc = w.shape
    assert K == Kw
    # Large row tiles to feed the MXU; pad rows to a tile multiple (no assert).
    tm = min(tm_max, _round_up(M, 8))
    Mp = _round_up(M, tm)
    xp = jnp.pad(x, ((0, Mp - M), (0, 0))) if Mp != M else x
    kern = functools.partial(_matmul_gelu_affine_kernel, use_bf16=_USE_BF16_MXU)
    out = pl.pallas_call(
        kern,
        out_shape=jax.ShapeDtypeStruct((Mp, Nc), jnp.float32),
        grid=(Mp // tm,),
        in_specs=[
            pl.BlockSpec((tm, K), lambda i: (i, 0)),
            pl.BlockSpec((K, Nc), lambda i: (0, 0)),   # weight stays resident
            pl.BlockSpec((1, Nc), lambda i: (0, 0)),
            pl.BlockSpec((1, Nc), lambda i: (0, 0)),
            pl.BlockSpec((1, Nc), lambda i: (0, 0)),
        ],
        out_specs=pl.BlockSpec((tm, Nc), lambda i: (i, 0)),
        compiler_params=pltpu.CompilerParams(
            dimension_semantics=("parallel",),
            vmem_limit_bytes=_VMEM_LIMIT),
    )(xp, w, b.reshape(1, -1), scale.reshape(1, -1), shift.reshape(1, -1))
    return out[:M] if Mp != M else out


# --------------------------------------------------------------------------
# Kernel 2: fused ConvMixer block
#   t = x + BN(GELU(depthwise_conv(x)))     (padding='same', in-kernel)
#   y = BN(GELU(t @ W_1x1 + b))             (no HBM round trip for t)
# --------------------------------------------------------------------------
def _block_kernel(x_ref, dww_ref, dwb_ref, s1_ref, t1_ref,
                  pww_ref, pwb_ref, s2_ref, t2_ref, o_ref, acc_ref,
                  *, ksize, H, W, use_bf16):
    pad = (ksize - 1) // 2
    x = x_ref[...].astype(jnp.float32)          # (1, H, W, C)
    w = dww_ref[...].astype(jnp.float32)        # (ksize, ksize, C)

    # Depthwise conv: accumulate taps into a VMEM scratch, initialised from
    # the bias.  'same' zero-padding handled by clipping each tap's output
    # window, so no padded activation copy ever hits HBM.
    acc_ref[...] = jnp.broadcast_to(dwb_ref[...], acc_ref.shape)
    for ky in range(ksize):
        dy = ky - pad
        oy0, oy1 = max(0, -dy), min(H, H - dy)
        ny = oy1 - oy0
        iy0 = oy0 + dy
        for kx in range(ksize):
            dx = kx - pad
            ox0, ox1 = max(0, -dx), min(W, W - dx)
            nx = ox1 - ox0
            ix0 = ox0 + dx
            if ny <= 0 or nx <= 0:
                continue
            acc_ref[:, oy0:oy1, ox0:ox1, :] = (
                acc_ref[:, oy0:oy1, ox0:ox1, :]
                + x[:, iy0:iy0 + ny, ix0:ix0 + nx, :] * w[ky, kx, :])

    # GELU -> BN affine -> residual (residual re-uses the already-loaded x).
    t = _gelu(acc_ref[...])
    t = t * s1_ref[...] + t1_ref[...]
    t = x + t                                   # (1, H, W, C)

    # Fused 1x1 conv + GELU + BN affine; (C, C) weight stays VMEM-resident.
    pw = pww_ref[...]
    if use_bf16:
        pw = pw.astype(jnp.bfloat16)
    for h in range(H):                          # 2-D (W, C) x (C, C) MXU ops
        row = t[0, h]                           # (W, C)
        if use_bf16:
            row = row.astype(jnp.bfloat16)
        y = jnp.dot(row, pw, preferred_element_type=jnp.float32) + pwb_ref[...]
        y = _gelu(y)
        o_ref[0, h, :, :] = y * s2_ref[...] + t2_ref[...]


def convmixer_block(x, lp, ksize):
    # x: (N, H, W, C) NHWC
    N, H, W, C = x.shape
    kern = functools.partial(_block_kernel, ksize=ksize, H=H, W=W,
                             use_bf16=_USE_BF16_MXU)
    return pl.pallas_call(
        kern,
        out_shape=jax.ShapeDtypeStruct((N, H, W, C), jnp.float32),
        grid=(N,),
        in_specs=[
            pl.BlockSpec((1, H, W, C), lambda n: (n, 0, 0, 0)),
            pl.BlockSpec((ksize, ksize, C), lambda n: (0, 0, 0)),
            pl.BlockSpec((1, C), lambda n: (0, 0)),   # dw bias
            pl.BlockSpec((1, C), lambda n: (0, 0)),   # bn1 scale
            pl.BlockSpec((1, C), lambda n: (0, 0)),   # bn1 shift
            pl.BlockSpec((C, C), lambda n: (0, 0)),   # 1x1 weight (resident)
            pl.BlockSpec((1, C), lambda n: (0, 0)),   # 1x1 bias
            pl.BlockSpec((1, C), lambda n: (0, 0)),   # bn2 scale
            pl.BlockSpec((1, C), lambda n: (0, 0)),   # bn2 shift
        ],
        out_specs=pl.BlockSpec((1, H, W, C), lambda n: (n, 0, 0, 0)),
        scratch_shapes=[pltpu.VMEM((1, H, W, C), jnp.float32)],
        compiler_params=pltpu.CompilerParams(
            dimension_semantics=("parallel",),
            vmem_limit_bytes=_VMEM_LIMIT),
    )(x, lp["dw_w"], lp["dw_b"].reshape(1, -1),
      lp["bn1_scale"].reshape(1, -1), lp["bn1_shift"].reshape(1, -1),
      lp["pw_w"], lp["pw_b"].reshape(1, -1),
      lp["bn2_scale"].reshape(1, -1), lp["bn2_shift"].reshape(1, -1))


# --------------------------------------------------------------------------
# Kernel 3: head = global average pool (H, W) + Linear   (one image per step)
# --------------------------------------------------------------------------
def _head_kernel(x_ref, w_ref, b_ref, o_ref):
    x = x_ref[...].astype(jnp.float32)                  # (1, H, W, C)
    H, W = x.shape[1], x.shape[2]
    pooled = jnp.sum(jnp.sum(x, axis=2), axis=1) * (1.0 / float(H * W))  # (1,C)
    o_ref[0] = jnp.dot(pooled, w_ref[...],
                       preferred_element_type=jnp.float32) + b_ref[...]


def head(x, w, b):
    N, H, W, C = x.shape
    Cw, ncp = w.shape
    assert Cw == C
    out = pl.pallas_call(
        _head_kernel,
        out_shape=jax.ShapeDtypeStruct((N, 1, ncp), jnp.float32),
        grid=(N,),
        in_specs=[
            pl.BlockSpec((1, H, W, C), lambda n: (n, 0, 0, 0)),
            pl.BlockSpec((C, ncp), lambda n: (0, 0)),
            pl.BlockSpec((1, ncp), lambda n: (0, 0)),
        ],
        out_specs=pl.BlockSpec((1, 1, ncp), lambda n: (n, 0, 0)),
        compiler_params=pltpu.CompilerParams(
            dimension_semantics=("parallel",),
            vmem_limit_bytes=_VMEM_LIMIT),
    )(x, w, b.reshape(1, -1))
    return out.reshape(N, ncp)


# --------------------------------------------------------------------------
# Parameter init (deterministic, synthetic), channel-padded to lane width
# --------------------------------------------------------------------------
def _bn_affine(dim):
    gamma = jnp.ones((dim,), jnp.float32)
    beta = jnp.zeros((dim,), jnp.float32)
    running_mean = jnp.zeros((dim,), jnp.float32)
    running_var = jnp.ones((dim,), jnp.float32)
    scale = gamma / jnp.sqrt(running_var + _BN_EPS)
    shift = beta - running_mean * scale
    return scale, shift


def _zpad(a, axis, new):
    padw = [(0, 0)] * a.ndim
    padw[axis] = (0, new - a.shape[axis])
    return jnp.pad(a, padw)


def init_params(key, *, dim, depth, kernel_size, patch_size, n_classes, cin=3):
    cp = _round_up(dim, _LANE)          # lane-dense channel dim
    ncp = _round_up(n_classes, _LANE)   # lane-dense class dim
    keys = iter(jax.random.split(key, 4 + 4 * depth))
    params = {"dim": dim, "cp": cp, "n_classes": n_classes, "ncp": ncp}

    # patch conv: torch weight (dim, cin, p, p) -> matmul weight (cin*p*p, dim)
    w1 = 0.02 * jax.random.normal(next(keys), (dim, cin, patch_size, patch_size),
                                  jnp.float32)
    params["patch_w"] = _zpad(w1.reshape(dim, cin * patch_size * patch_size).T, 1, cp)
    params["patch_b"] = _zpad(0.01 * jax.random.normal(next(keys), (dim,), jnp.float32), 0, cp)
    s0, t0 = _bn_affine(dim)
    params["bn0_scale"] = _zpad(s0, 0, cp)
    params["bn0_shift"] = _zpad(t0, 0, cp)

    layers = []
    for _ in range(depth):
        dw = 0.1 * jax.random.normal(next(keys), (dim, 1, kernel_size, kernel_size),
                                     jnp.float32)
        dw_b = 0.01 * jax.random.normal(next(keys), (dim,), jnp.float32)
        pw = 0.1 * jax.random.normal(next(keys), (dim, dim, 1, 1), jnp.float32)
        pw_b = 0.01 * jax.random.normal(next(keys), (dim,), jnp.float32)
        s1, t1 = _bn_affine(dim)
        s2, t2 = _bn_affine(dim)
        layers.append(dict(
            dw_w=_zpad(dw[:, 0].transpose(1, 2, 0), 2, cp),      # (k, k, cp)
            dw_b=_zpad(dw_b, 0, cp),
            bn1_scale=_zpad(s1, 0, cp), bn1_shift=_zpad(t1, 0, cp),
            pw_w=_zpad(_zpad(pw[:, :, 0, 0].T, 0, cp), 1, cp),   # (cp, cp)
            pw_b=_zpad(pw_b, 0, cp),
            bn2_scale=_zpad(s2, 0, cp), bn2_shift=_zpad(t2, 0, cp),
        ))
    params["layers"] = layers

    head_w = 0.02 * jax.random.normal(next(keys), (n_classes, dim), jnp.float32)
    params["head_w"] = _zpad(_zpad(head_w.T, 0, cp), 1, ncp)     # (cp, ncp)
    params["head_b"] = _zpad(0.01 * jax.random.normal(next(keys), (n_classes,),
                                                      jnp.float32), 0, ncp)
    return params


# --------------------------------------------------------------------------
# Full forward pass
# --------------------------------------------------------------------------
def convmixer_forward(x_nchw, params, *, patch_size, kernel_size):
    N, Cin, H, W = x_nchw.shape
    p = patch_size
    Hp, Wp = H // p, W // p
    cp = params["cp"]

    # --- patch embedding: Conv2d(3, dim, k=p, stride=p) == matmul on patches ---
    patches = x_nchw.reshape(N, Cin, Hp, p, Wp, p)
    patches = patches.transpose(0, 2, 4, 1, 3, 5).reshape(N * Hp * Wp, Cin * p * p)
    y = matmul_gelu_affine(patches.astype(jnp.float32), params["patch_w"],
                           params["patch_b"], params["bn0_scale"],
                           params["bn0_shift"])
    x = y.reshape(N, Hp, Wp, cp)                 # NHWC, lane-padded channels

    # --- fused ConvMixer blocks (depthwise + GELU + BN + residual + 1x1 + GELU + BN) ---
    for lp in params["layers"]:
        x = convmixer_block(x, lp, kernel_size)

    # --- head: AdaptiveAvgPool2d((1,1)) + Flatten + Linear ---
    logits = head(x, params["head_w"], params["head_b"])
    return logits[:, :params["n_classes"]]


if __name__ == "__main__":
    key = jax.random.PRNGKey(0)
    kx, kp = jax.random.split(key)

    # small config: dim=32, depth=2, kernel_size=3, patch_size=7, n_classes=10
    dim, depth, ksize, patch, n_classes = 32, 2, 3, 7, 10
    N, Cin, H, W = 2, 3, 28, 28

    x = jax.random.normal(kx, (N, Cin, H, W), jnp.float32)
    params = init_params(kp, dim=dim, depth=depth, kernel_size=ksize,
                         patch_size=patch, n_classes=n_classes)

    out = convmixer_forward(x, params, patch_size=patch, kernel_size=ksize)
    out = jax.block_until_ready(out)

    assert out.shape == (N, n_classes), out.shape
    assert bool(jnp.all(jnp.isfinite(out)))
    print("KERNEL_OK")
</pallas_src>

<mosaic_0001>
module attributes {stable_mosaic.version = 11 : i64} {
  func.func @_matmul_gelu_affine_kernel(%arg0: i32, %arg1: memref<32x147xf32, #tpu.memory_space<vmem>>, %arg2: memref<147x128xf32, #tpu.memory_space<vmem>>, %arg3: memref<1x128xf32, #tpu.memory_space<vmem>>, %arg4: memref<1x128xf32, #tpu.memory_space<vmem>>, %arg5: memref<1x128xf32, #tpu.memory_space<vmem>>, %arg6: memref<32x128xf32, #tpu.memory_space<vmem>>) attributes {dimension_semantics = [#tpu.dimension_semantics<parallel>], iteration_bounds = array<i64: 1>, scalar_prefetch = 0 : i64, scratch_operands = 0 : i64, tpu.core_type = #tpu.core_type<tc>, window_params = [{transform_indices = @transform_0, window_bounds = array<i64: 32, 147>}, {pipeline_mode = #tpu.pipeline_mode<synchronous>, transform_indices = @transform_1, window_bounds = array<i64: 147, 128>}, {pipeline_mode = #tpu.pipeline_mode<synchronous>, transform_indices = @transform_2, window_bounds = array<i64: 1, 128>}, {pipeline_mode = #tpu.pipeline_mode<synchronous>, transform_indices = @transform_3, window_bounds = array<i64: 1, 128>}, {pipeline_mode = #tpu.pipeline_mode<synchronous>, transform_indices = @transform_4, window_bounds = array<i64: 1, 128>}, {transform_indices = @transform_5, window_bounds = array<i64: 32, 128>}]} {
    %c0 = arith.constant 0 : index
    %c0_0 = arith.constant 0 : index
    %0 = vector.load %arg1[%c0, %c0_0] : memref<32x147xf32, #tpu.memory_space<vmem>>, vector<32x147xf32>
    %c0_1 = arith.constant 0 : index
    %c0_2 = arith.constant 0 : index
    %1 = vector.load %arg2[%c0_1, %c0_2] : memref<147x128xf32, #tpu.memory_space<vmem>>, vector<147x128xf32>
    %cst = arith.constant dense<0.000000e+00> : vector<32x128xf32>
    %2 = tpu.matmul %0, %1, %cst {dimension_numbers = #tpu.dot_dimension_numbers<[1], [0], [0], [1], [0, 0, 1, 1], [], []>} : vector<32x147xf32>, vector<147x128xf32>, vector<32x128xf32> -> vector<32x128xf32>
    %c0_3 = arith.constant 0 : index
    %c0_4 = arith.constant 0 : index
    %3 = vector.load %arg3[%c0_3, %c0_4] : memref<1x128xf32, #tpu.memory_space<vmem>>, vector<1x128xf32>
    %4 = vector.broadcast %3 : vector<1x128xf32> to vector<32x128xf32>
    %5 = arith.addf %2, %4 : vector<32x128xf32>
    %cst_5 = arith.constant 5.000000e-01 : f32
    %6 = vector.broadcast %cst_5 : f32 to vector<32x128xf32>
    %7 = arith.mulf %6, %5 : vector<32x128xf32>
    %cst_6 = arith.constant 0.707106769 : f32
    %8 = vector.broadcast %cst_6 : f32 to vector<32x128xf32>
    %9 = arith.mulf %5, %8 : vector<32x128xf32>
    %10 = math.erf %9 : vector<32x128xf32>
    %cst_7 = arith.constant 1.000000e+00 : f32
    %11 = vector.broadcast %cst_7 : f32 to vector<32x128xf32>
    %12 = arith.addf %11, %10 : vector<32x128xf32>
    %13 = arith.mulf %7, %12 : vector<32x128xf32>
    %c0_8 = arith.constant 0 : index
    %c0_9 = arith.constant 0 : index
    %14 = vector.load %arg4[%c0_8, %c0_9] : memref<1x128xf32, #tpu.memory_space<vmem>>, vector<1x128xf32>
    %15 = vector.broadcast %14 : vector<1x128xf32> to vector<32x128xf32>
    %16 = arith.mulf %13, %15 : vector<32x128xf32>
    %c0_10 = arith.constant 0 : index
    %c0_11 = arith.constant 0 : index
    %17 = vector.load %arg5[%c0_10, %c0_11] : memref<1x128xf32, #tpu.memory_space<vmem>>, vector<1x128xf32>
    %18 = vector.broadcast %17 : vector<1x128xf32> to vector<32x128xf32>
    %19 = arith.addf %16, %18 : vector<32x128xf32>
    %c0_12 = arith.constant 0 : index
    %c0_13 = arith.constant 0 : index
    %20 = vector.load %arg6[%c0_12, %c0_13] : memref<32x128xf32, #tpu.memory_space<vmem>>, vector<32x128xf32>
    tpu.vector_store %arg6[%c0_12, %c0_13], %19 {strides = array<i32>} : memref<32x128xf32, #tpu.memory_space<vmem>>, vector<32x128xf32>,
    return
  }
  func.func @transform_0(%arg0: i32) -> (i32, i32) {
    %c0_i32 = arith.constant 0 : i32
    %c0_i32_0 = arith.constant 0 : i32
    return %arg0, %c0_i32 : i32, i32
  }
  func.func @transform_1(%arg0: i32) -> (i32, i32) {
    %c0_i32 = arith.constant 0 : i32
    %c0_i32_0 = arith.constant 0 : i32
    %c0_i32_1 = arith.constant 0 : i32
    return %c0_i32, %c0_i32_0 : i32, i32
  }
  func.func @transform_2(%arg0: i32) -> (i32, i32) {
    %c0_i32 = arith.constant 0 : i32
    %c0_i32_0 = arith.constant 0 : i32
    %c0_i32_1 = arith.constant 0 : i32
    return %c0_i32, %c0_i32_0 : i32, i32
  }
  func.func @transform_3(%arg0: i32) -> (i32, i32) {
    %c0_i32 = arith.constant 0 : i32
    %c0_i32_0 = arith.constant 0 : i32
    %c0_i32_1 = arith.constant 0 : i32
    return %c0_i32, %c0_i32_0 : i32, i32
  }
  func.func @transform_4(%arg0: i32) -> (i32, i32) {
    %c0_i32 = arith.constant 0 : i32
    %c0_i32_0 = arith.constant 0 : i32
    %c0_i32_1 = arith.constant 0 : i32
    return %c0_i32, %c0_i32_0 : i32, i32
  }
  func.func @transform_5(%arg0: i32) -> (i32, i32) {
    %c0_i32 = arith.constant 0 : i32
    %c0_i32_0 = arith.constant 0 : i32
    return %arg0, %c0_i32 : i32, i32
  }
}

</mosaic_0001>

<llo_original>
// kernel: tpu_custom_call.1
$region0: #{tpu_custom_call.1}
  #allocation0 [shape = 'u32[]', space=smem, size = 0x4, offset = 0x4, fixed_abs, tag = 'smem constant byte address 0x4 - core index']
  #allocation1 [shape = 'u32[144,128]{1,0:T(1,128)}', space=vmem, size = 0x12000, scoped, tag = 'internal scratch']
  %s0 = inlined_call_operand.hbm [shape: f32[32,147], index: 0, kind: input, shape index: {}]
  %s1 = inlined_call_operand.hbm [shape: f32[147,128], index: 1, kind: input, shape index: {}]
  %s2 = inlined_call_operand.vmem [shape: f32[1,128], index: 2, kind: input, shape index: {}]
  %s3 = inlined_call_operand.vmem [shape: f32[1,128], index: 3, kind: input, shape index: {}]
  %s4 = inlined_call_operand.vmem [shape: f32[1,128], index: 4, kind: input, shape index: {}]
  %s5 = inlined_call_operand.hbm [shape: f32[32,128], index: 5, kind: output, shape index: {}]
  %s6 = sld [smem:[#allocation0]]
  $region38: #{tpu_custom_call.1} parent=0
    _
  %s8 = ssub.s32 1, %s6
  %s9 = scalar_select 0, %s8, %s6
  $region1: #{tpu_custom_call.1} parent=0
    #allocation2 [shape = 'u8[32768]{0}', space=vmem, size = 0x8000, scoped, tag = 'input window, operand 0, single buffered']
    #allocation3 [shape = 's32[1]{0}', space=sflag, size = 0x4, scoped, tag = 'scoped memory for tpu_custom_call.1']
    #allocation4 [shape = 's32[1]{0}', space=sflag, size = 0x4, scoped, tag = 'scoped memory for tpu_custom_call.1']
    #allocation5 [shape = 'u8[77824]{0}', space=vmem, size = 0x13000, scoped, tag = 'input window, operand 1, single buffered']
    #allocation6 [shape = 's32[1]{0}', space=sflag, size = 0x4, scoped, tag = 'scoped memory for tpu_custom_call.1']
    #allocation7 [shape = 'u8[16384]{0}', space=vmem, size = 0x4000, scoped, tag = 'output window, operand 0, single buffered']
    %10 = vsyncpa [#allocation3], 0
    %11 = vsyncpa [#allocation6], 0
    %12 = vsyncpa [#allocation4], 0
    // Predicated region
    $region2: #{tpu_custom_call.1} parent=1 // pred_check
      _
    $region3: #{tpu_custom_call.1} parent=1 // pred_check_branch
      %14 = sbr.rel (0) target = $region5
    $region4: #{tpu_custom_call.1} parent=1 // pred_region
      %s16 = ssub.s32 1024, 1024
      %17 = vsyncadd [#allocation3], %s16
      %s18 = sshll.u32 [#allocation2], 4
      %s19 = int_to_ptr.vmem [resolvable:$true] %s18
      %24 = dma.hbm_to_vmem [thread:$0]  %s0, 1024, %s19, [#allocation3], 256, 256, 16
    $region5: #{tpu_custom_call.1} parent=1 // pred_fallthru
      _
    // Predicated region
    $region6: #{tpu_custom_call.1} parent=1 // pred_check
      _
    $region7: #{tpu_custom_call.1} parent=1 // pred_check_branch
      %26 = sbr.rel (0) target = $region9
    $region8: #{tpu_custom_call.1} parent=1 // pred_region
      %s28 = ssub.s32 2432, 2432
      %29 = vsyncadd [#allocation6], %s28
      %s30 = sshll.u32 [#allocation5], 4
      %s31 = int_to_ptr.vmem [resolvable:$true] %s30
      %36 = dma.hbm_to_vmem [thread:$0]  %s1, 2432, %s31, [#allocation6], 128, 128, 8
    $region9: #{tpu_custom_call.1} parent=1 // pred_fallthru
      _
    // Predicated region
    $region10: #{tpu_custom_call.1} parent=1 // pred_check
      _
    $region11: #{tpu_custom_call.1} parent=1 // pred_check_branch
      %38 = sbr.rel (0) target = $region13
    $region12: #{tpu_custom_call.1} parent=1 // pred_region
      _
    $region13: #{tpu_custom_call.1} parent=1 // pred_fallthru
      _
    // Predicated region
    $region14: #{tpu_custom_call.1} parent=1 // pred_check
      _
    $region15: #{tpu_custom_call.1} parent=1 // pred_check_branch
      %40 = sbr.rel (0) target = $region17
    $region16: #{tpu_custom_call.1} parent=1 // pred_region
      _
    $region17: #{tpu_custom_call.1} parent=1 // pred_fallthru
      _
    // Predicated region
    $region18: #{tpu_custom_call.1} parent=1 // pred_check
      _
    $region19: #{tpu_custom_call.1} parent=1 // pred_check_branch
      %42 = sbr.rel (0) target = $region21
    $region20: #{tpu_custom_call.1} parent=1 // pred_region
      _
    $region21: #{tpu_custom_call.1} parent=1 // pred_fallthru
      _
    // Predicated region
    $region22: #{tpu_custom_call.1} parent=1 // pred_check
      _
    $region23: #{tpu_custom_call.1} parent=1 // pred_check_branch
      %44 = sbr.rel (0) target = $region25
    $region24: #{tpu_custom_call.1} parent=1 // pred_region
      %45 = dma.done [#allocation3], 1024
    $region25: #{tpu_custom_call.1} parent=1 // pred_fallthru
      _
    // Predicated region
    $region26: #{tpu_custom_call.1} parent=1 // pred_check
      _
    $region27: #{tpu_custom_call.1} parent=1 // pred_check_branch
      %47 = sbr.rel (0) target = $region29
    $region28: #{tpu_custom_call.1} parent=1 // pred_region
      %48 = dma.done [#allocation6], 2432
    $region29: #{tpu_custom_call.1} parent=1 // pred_fallthru
      _
    %v49 = vld [vmem:[#allocation2] sm:$0xff]
    %v50 = vld [vmem:[#allocation2 + $0x8] sm:$0xff]
    %v51 = vld [vmem:[#allocation2 + $0x10] sm:$0xff]
    %v52 = vld [vmem:[#allocation2 + $0x18] sm:$0xff]
    %v53 = vld [vmem:[#allocation2 + $0x20] sm:$0xff]
    %v54 = vld [vmem:[#allocation2 + $0x28] sm:$0xff]
    %v55 = vld [vmem:[#allocation2 + $0x30] sm:$0xff]
    %v56 = vld [vmem:[#allocation2 + $0x38] sm:$0xff]
    %v57 = vld [vmem:[#allocation5] sm:$0xff]
    %v58 = vld [vmem:[#allocation5 + $0x8] sm:$0xff]
    %v59 = vld [vmem:[#allocation5 + $0x10] sm:$0xff]
    %v60 = vld [vmem:[#allocation5 + $0x18] sm:$0xff]
    %v61 = vld [vmem:[#allocation5 + $0x20] sm:$0xff]
    %v62 = vld [vmem:[#allocation5 + $0x28] sm:$0xff]
    %v63 = vld [vmem:[#allocation5 + $0x30] sm:$0xff]
    %v64 = vld [vmem:[#allocation5 + $0x38] sm:$0xff]
    %v65 = vld [vmem:[#allocation5 + $0x40] sm:$0xff]
    %v66 = vld [vmem:[#allocation5 + $0x48] sm:$0xff]
    %v67 = vld [vmem:[#allocation5 + $0x50] sm:$0xff]
    %v68 = vld [vmem:[#allocation5 + $0x58] sm:$0xff]
    %v69 = vld [vmem:[#allocation5 + $0x60] sm:$0xff]
    %v70 = vld [vmem:[#allocation5 + $0x68] sm:$0xff]
    %v71 = vld [vmem:[#allocation5 + $0x70] sm:$0xff]
    %v72 = vld [vmem:[#allocation5 + $0x78] sm:$0xff]
    %v73 = vld [vmem:[#allocation5 + $0x80] sm:$0xff]
    %v74 = vld [vmem:[#allocation5 + $0x88] sm:$0xff]
    %v75 = vld [vmem:[#allocation5 + $0x90] sm:$0x7]
    %v76 = vld [vmem:[%s2] sm:$0x1]
    %v78 = vlaneseq
    %v79 = vshrl.u32 %v78, 7
    %v80 = vsub.s32 0, %v79
    %v81 = vrot.slane %v76, %v80
    %vm83 = vcmask 154624
    %v85 = vsel %vm83, %v50, 0
    %v88 = vsel %vm83, %v52, 0
    %v91 = vsel %vm83, %v54, 0
    %v94 = vsel %vm83, %v56, 0
    %vm96 = vcmask 1042432
    %v98 = vsel %vm96, %v75, 0
    %100 = vmatprep.subr.mxu0 0.0
    %101 = vmatpush1.msra.mxu0 %v57
    %102 = vmatprep.subr.mxu0 0.0
    %103 = vmatpush1.msra.mxu0 %v58
    %104 = vmatprep.subr.mxu0 0.0
    %105 = vmatpush1.msra.mxu0 %v59
    %106 = vmatprep.subr.mxu0 0.0
    %107 = vmatpush1.msra.mxu0 %v60
    %108 = vmatprep.subr.mxu0 0.0
    %109 = vmatpush1.msra.mxu0 %v61
    %110 = vmatprep.subr.mxu0 0.0
    %111 = vmatpush1.msra.mxu0 %v62
    %112 = vmatprep.subr.mxu0 0.0
    %113 = vmatpush1.msra.mxu0 %v63
    %114 = vmatprep.subr.mxu0 0.0
    %115 = vmatpush1.msra.mxu0 %v64
    %116 = vmatprep.subr.mxu0 0.0
    %117 = vmatpush1.msra.mxu0 %v65
    %118 = vmatprep.subr.mxu0 0.0
    %119 = vmatpush1.msra.mxu0 %v66
    %120 = vmatprep.subr.mxu0 0.0
    %121 = vmatpush1.msra.mxu0 %v67
    %122 = vmatprep.subr.mxu0 0.0
    %123 = vmatpush1.msra.mxu0 %v68
    %124 = vmatprep.subr.mxu0 0.0
    %125 = vmatpush1.msra.mxu0 %v69
    %126 = vmatprep.subr.mxu0 0.0
    %127 = vmatpush1.msra.mxu0 %v70
    %128 = vmatprep.subr.mxu0 0.0
    %129 = vmatpush1.msra.mxu0 %v71
    %130 = vmatprep.subr.mxu0 0.0
    %131 = vmatpush1.msra.mxu0 %v72
    %132 = vmatprep.subr.mxu0 0.0
    %133 = vmatpush1.msra.mxu0 %v73
    %134 = vmatprep.subr.mxu0 0.0
    %135 = vmatpush1.msra.mxu0 %v74
    %136 = vmatprep.subr.mxu0 0.0
    %137 = vmatpush1.msra.mxu0 %v98
    %138 = vmatprep.subr.mxu0 0.0
    %139 = vmatpush1.msra.mxu0 0.0
    %140 = vmatprep.subr.mxu0 0.0
    %141 = vmatpush1.msra.mxu0 0.0
    %142 = vmatprep.subr.mxu0 0.0
    %143 = vmatpush1.msra.mxu0 0.0
    %144 = vmatprep.subr.mxu0 0.0
    %145 = vmatpush1.msra.mxu0 0.0
    %146 = vmatprep.subr.mxu0 0.0
    %147 = vmatpush1.msra.mxu0 0.0
    %148 = vmatprep.subr.mxu0 0.0
    %149 = vmatpush1.msra.mxu0 0.0
    %150 = vmatprep.subr.mxu0 0.0
    %151 = vmatpush1.msra.mxu0 0.0
    %152 = vmatprep.subr.mxu0 0.0
    %153 = vmatpush1.msra.mxu0 0.0
    %154 = vmatprep.subr.mxu0 0.0
    %155 = vmatpush1.msra.mxu0 0.0
    %156 = vmatprep.subr.mxu0 0.0
    %157 = vmatpush1.msra.mxu0 0.0
    %158 = vmatprep.subr.mxu0 0.0
    %159 = vmatpush1.msra.mxu0 0.0
    %160 = vmatprep.subr.mxu0 0.0
    %161 = vmatpush1.msra.mxu0 0.0
    %162 = vmatprep.subr.mxu0 0.0
    %163 = vmatpush1.msra.mxu0 0.0
    %164 = vmatprep.mubr.f32.mxu0 %v85
    %165 = vmatmul.mubr.f32.gmra.mrb[0].mxu0 %v49
    %v166 = vpop.f32.mrb[0].mxu0
    %v167 = vadd.f32 %v81, %v166
    %v168 = vpop.f32.mrb[0].mxu0
    %169 = vmatprep.mubr.f32.mxu0 %v88
    %170 = vmatmul.mubr.f32.gmra.mrb[0].mxu0 %v51
    %v171 = vpop.f32.mrb[0].mxu0
    %v172 = vadd.f32 %v81, %v171
    %v173 = vpop.f32.mrb[0].mxu0
    %174 = vmatprep.mubr.f32.mxu0 %v91
    %175 = vmatmul.mubr.f32.gmra.mrb[0].mxu0 %v53
    %v176 = vpop.f32.mrb[0].mxu0
    %v177 = vadd.f32 %v81, %v176
    %v178 = vpop.f32.mrb[0].mxu0
    %179 = vmatprep.mubr.f32.mxu0 %v94
    %180 = vmatmul.mubr.f32.gmra.mrb[0].mxu0 %v55
    %v181 = vpop.f32.mrb[0].mxu0
    %v182 = vadd.f32 %v81, %v181
    %v183 = vpop.f32.mrb[0].mxu0
    %184 = vdwg.mxu0
    %v185 = vmul.f32 %v167, 0.5
    %v186 = vmul.f32 %v172, 0.5
    %v187 = vmul.f32 %v177, 0.5
    %v188 = vmul.f32 %v182, 0.5
    %v189 = vmul.f32 %v167, 0.70710677
    %v190 = vmul.f32 %v172, 0.70710677
    %v191 = vmul.f32 %v177, 0.70710677
    %v192 = vmul.f32 %v182, 0.70710677
    %v193 = verf.f32.pop %v189
    %v194 = verf.f32.pop %v190
    %v195 = verf.f32.pop %v191
    %v196 = verf.f32.pop %v192
    %v197 = vadd.f32 %v193, 1.0
    %v198 = vadd.f32 %v194, 1.0
    %v199 = vadd.f32 %v195, 1.0
    %v200 = vadd.f32 %v196, 1.0
    %v201 = vmul.f32 %v185, %v197
    %v202 = vmul.f32 %v186, %v198
    %v203 = vmul.f32 %v187, %v199
    %v204 = vmul.f32 %v188, %v200
    %v205 = vld [vmem:[%s3] sm:$0x1]
    %v207 = vlaneseq
    %v208 = vshrl.u32 %v207, 7
    %v209 = vsub.s32 0, %v208
    %v210 = vrot.slane %v205, %v209
    %v212 = vmul.f32 %v201, %v210
    %v213 = vmul.f32 %v202, %v210
    %v214 = vmul.f32 %v203, %v210
    %v215 = vmul.f32 %v204, %v210
    %v216 = vld [vmem:[%s4] sm:$0x1]
    %v218 = vlaneseq
    %v219 = vshrl.u32 %v218, 7
    %v220 = vsub.s32 0, %v219
    %v221 = vrot.slane %v216, %v220
    %v223 = vadd.f32 %v212, %v221
    %v224 = vadd.f32 %v213, %v221
    %v225 = vadd.f32 %v214, %v221
    %v226 = vadd.f32 %v215, %v221
    %227 = vst [vmem:[#allocation7] sm:$0xff] %v223
    %228 = vst [vmem:[#allocation7 + $0x8] sm:$0xff] %v224
    %229 = vst [vmem:[#allocation7 + $0x10] sm:$0xff] %v225
    %230 = vst [vmem:[#allocation7 + $0x18] sm:$0xff] %v226
    // Predicated region
    $region30: #{tpu_custom_call.1} parent=1 // pred_check
      _
    $region31: #{tpu_custom_call.1} parent=1 // pred_check_branch
      %232 = sbr.rel (0) target = $region33
    $region32: #{tpu_custom_call.1} parent=1 // pred_region
      %s234 = ssub.s32 512, 512
      %235 = vsyncadd [#allocation4], %s234
      %s236 = sshll.u32 [#allocation7], 4
      %s237 = int_to_ptr.vmem [resolvable:$true] %s236
      %242 = dma.vmem_to_hbm [thread:$0]  %s237, 512, %s5, [#allocation4], 128, 128, 8
    $region33: #{tpu_custom_call.1} parent=1 // pred_fallthru
      _
    // Predicated region
    $region34: #{tpu_custom_call.1} parent=1 // pred_check
      _
    $region35: #{tpu_custom_call.1} parent=1 // pred_check_branch
      %244 = sbr.rel (0) target = $region37
    $region36: #{tpu_custom_call.1} parent=1 // pred_region
      %245 = dma.done [#allocation4], 512
    $region37: #{tpu_custom_call.1} parent=1 // pred_fallthru
      _
    %246 = vsyncpa [#allocation3], 1
    %247 = vsyncpa [#allocation6], 1
    %248 = vsyncpa [#allocation4], 1

</llo_original>
